<compile_context>
chip_gen: v6e
topology: v6e:2x2x1
jax: 0.10.0
libtpu: 0.0.40
codegen_flags: <defaults>
</compile_context>

<pallas_src>
import jax
import jax.numpy as jnp
from jax import lax
from jax.experimental import pallas as pl
from jax.experimental.pallas import tpu as pltpu

_LANES = 128
_SUBLANES = 8
_MAX_TILE_ROWS = 8192   # (8192, 128) f32 block = 4 MiB per input per pipeline buffer


def _round_up(x, m):
    return -(-x // m) * m


def _num_tensorcores():
    """Best-effort TensorCores per device (v7x / megacore: 2, v5e/v6e: 1)."""
    try:
        info = pltpu.get_tpu_info()
        for name in ("num_cores", "core_count", "num_tensorcores",
                     "tensorcores_per_chip", "num_cores_per_chip"):
            val = getattr(info, name, None)
            if isinstance(val, int) and 1 <= val <= 8:
                return val
    except Exception:
        pass
    try:
        dev = jax.devices()[0]
        for name in ("num_cores", "core_count"):
            val = getattr(dev, name, None)
            if isinstance(val, int) and 1 <= val <= 8:
                return val
        kind = dev.device_kind.lower()
        single_core = ("lite" in kind or "v5e" in kind or "v6e" in kind
                       or "v2" in kind or "v3" in kind)
        return 1 if single_core else 2
    except Exception:
        return 1


def _partial_sums(x2, t2, n_total, tile_rows, n_tiles, tiles_per_split, num_splits):
    """Returns (num_splits, 4, 8, 128) per-lane partial sums:
       [0] sum of per-element BCE-with-logits
       [1] sum of binarized_target * sigmoid   (intersection)
       [2] sum of sigmoid(outputs)
       [3] sum of binarized_target
    """
    n_full_rows = n_total // _LANES          # rows made entirely of valid elements
    rem_lanes = n_total % _LANES             # valid lanes in the boundary row
    needs_mask = (n_tiles * tile_rows * _LANES) != n_total
    has_overhang = (num_splits * tiles_per_split) != n_tiles

    def kernel(x_ref, t_ref, out_ref):
        c = pl.program_id(0)                 # split (TensorCore) index
        i = pl.program_id(1)                 # tile index within the split

        @pl.when(i == 0)
        def _():
            out_ref[...] = jnp.zeros_like(out_ref)

        tile_idx = c * tiles_per_split + i   # un-clamped global tile index

        def fold(v):
            # (tile_rows, 128) -> (8, 128): VALU adds over sublane groups only.
            return jnp.sum(
                v.reshape(tile_rows // _SUBLANES, _SUBLANES, _LANES), axis=0)

        def accumulate(bce_v, inter_v, sig_v, tb_v):
            out_ref[0] += fold(bce_v)        # sum of per-element BCE
            out_ref[1] += fold(inter_v)      # intersection
            out_ref[2] += fold(sig_v)        # sum(sigmoid)
            out_ref[3] += fold(tb_v)         # sum(binarized targets)

        def body():
            x = x_ref[...].astype(jnp.float32)
            t = t_ref[...].astype(jnp.float32)

            # Shared transcendental: z = exp(-|x|) feeds BCE tail and sigmoid.
            z = jnp.exp(-jnp.abs(x))
            a = 1.0 + z
            inv = pl.reciprocal(a, approx=True)        # EUP, not a VALU divide
            inv = inv * (2.0 - a * inv)                # one Newton step -> ~f32 exact
            sig = jnp.where(x >= 0.0, inv, z * inv)    # stable sigmoid
            bce = jnp.maximum(x, 0.0) - x * t + jnp.log1p(z)   # stable BCE w/ logits
            tb = (t == 1.0).astype(jnp.float32)        # binarized targets

            if not needs_mask:
                accumulate(bce, tb * sig, sig, tb)
                return

            is_tail = tile_idx == n_tiles - 1

            @pl.when(tile_idx != n_tiles - 1)
            def _():
                # Interior tiles: fully valid, no masking work at all.
                accumulate(bce, tb * sig, sig, tb)

            @pl.when(is_tail)
            def _():
                # Only the single boundary tile pays for the iota+select mask.
                row_ids = lax.broadcasted_iota(jnp.int32, (tile_rows, _LANES), 0)
                g_row = tile_idx * tile_rows + row_ids
                valid = g_row < n_full_rows
                if rem_lanes:
                    lane_ids = lax.broadcasted_iota(
                        jnp.int32, (tile_rows, _LANES), 1)
                    valid = valid | ((g_row == n_full_rows)
                                     & (lane_ids < rem_lanes))
                zero = jnp.zeros_like(bce)
                bce_m = jnp.where(valid, bce, zero)
                sig_m = jnp.where(valid, sig, zero)
                tb_m = jnp.where(valid, tb, zero)
                accumulate(bce_m, tb_m * sig_m, sig_m, tb_m)

        if has_overhang:
            # Uneven split: skip the duplicated (clamped) step of the short
            # split entirely -- no compute, and the clamped index_map means
            # no new DMA either.
            pl.when(tile_idx < n_tiles)(body)
        else:
            body()

    def in_map(c, i):
        # Clamp so an overhang step re-requests the previous block index
        # (pipeline skips the re-fetch); its compute is skipped by pl.when.
        return (jnp.minimum(c * tiles_per_split + i, n_tiles - 1), 0)

    bytes_in = x2.size * x2.dtype.itemsize + t2.size * t2.dtype.itemsize
    cost = pl.CostEstimate(
        flops=int(14 * n_total),
        transcendentals=int(3 * n_total),   # exp + log1p + reciprocal per element
        bytes_accessed=int(bytes_in + num_splits * 4 * _SUBLANES * _LANES * 4),
    )

    return pl.pallas_call(
        kernel,
        out_shape=jax.ShapeDtypeStruct(
            (num_splits, 4, _SUBLANES, _LANES), jnp.float32),
        grid_spec=pl.GridSpec(
            grid=(num_splits, tiles_per_split),
            in_specs=[
                pl.BlockSpec((tile_rows, _LANES), in_map),
                pl.BlockSpec((tile_rows, _LANES), in_map),
            ],
            out_specs=pl.BlockSpec((None, 4, _SUBLANES, _LANES),
                                   lambda c, i: (c, 0, 0, 0)),
        ),
        compiler_params=pltpu.CompilerParams(
            dimension_semantics=("parallel", "arbitrary"),
            vmem_limit_bytes=32 * 1024 * 1024),
        cost_estimate=cost,
    )(x2, t2)


def _combine(sum_bce, intersection, sum_sig, sum_tb, n_total, jaccard_weight, smooth):
    loss = sum_bce / n_total                 # BCEWithLogitsLoss mean reduction
    # NOTE: jaccard_weight is a static python value, mirroring the torch
    # module's `if self.jaccard_weight:` behavior.
    if jaccard_weight:
        union = sum_sig + sum_tb
        loss = loss - jaccard_weight * jnp.log(
            (intersection + smooth) / (union - intersection + smooth))
    return loss


def _jax_partial(flat_x, flat_t):
    x = flat_x.astype(jnp.float32)
    t = flat_t.astype(jnp.float32)
    bce = jnp.maximum(x, 0.0) - x * t + jnp.log1p(jnp.exp(-jnp.abs(x)))
    sig = jax.nn.sigmoid(x)
    tb = (t == 1.0).astype(jnp.float32)
    return jnp.sum(bce), jnp.sum(tb * sig), jnp.sum(sig), jnp.sum(tb)


def bce_jaccard_with_logits_loss(outputs, targets, jaccard_weight=1.0, smooth=1.0):
    if outputs.shape != targets.shape:
        raise ValueError(
            "size mismatch, {} != {}".format(outputs.shape, targets.shape))

    n_total = int(outputs.size)
    flat_x = outputs.reshape(-1)
    flat_t = targets.reshape(-1)

    if n_total < _SUBLANES * _LANES:
        # Tiny input: a kernel launch is not worth it.
        s = _jax_partial(flat_x, flat_t)
        return _combine(s[0], s[1], s[2], s[3], n_total, jaccard_weight, smooth)

    rem = n_total % _LANES
    if rem:
        # Rare path (numel not a multiple of 128): one pad copy; the padded
        # elements are zeroed by the in-kernel tail mask.
        # TODO(synk): a 1-D-block kernel variant would avoid this copy too.
        pad = _LANES - rem
        flat_x = jnp.pad(flat_x, (0, pad))
        flat_t = jnp.pad(flat_t, (0, pad))

    rows = flat_x.size // _LANES
    x2 = flat_x.reshape(rows, _LANES)        # free row-major reshape, no copy
    t2 = flat_t.reshape(rows, _LANES)

    num_cores = _num_tensorcores()
    per_split_rows = -(-rows // max(num_cores, 1))
    tile_rows = max(_SUBLANES,
                    min(_MAX_TILE_ROWS, _round_up(per_split_rows, _SUBLANES)))
    n_tiles = -(-rows // tile_rows)
    num_splits = max(1, min(num_cores, n_tiles))
    tiles_per_split = -(-n_tiles // num_splits)

    partials = _partial_sums(x2, t2, n_total, tile_rows, n_tiles,
                             tiles_per_split, num_splits)

    # Tiny final reduction + scalar combine in plain JAX glue.
    sums = jnp.sum(partials, axis=(0, 2, 3))     # (4,)
    return _combine(sums[0], sums[1], sums[2], sums[3],
                    n_total, jaccard_weight, smooth)


def _reference(outputs, targets, jaccard_weight=1.0, smooth=1.0):
    x = outputs.astype(jnp.float32)
    t = targets.astype(jnp.float32)
    bce = jnp.mean(jnp.maximum(x, 0.0) - x * t + jnp.log1p(jnp.exp(-jnp.abs(x))))
    tb = (t == 1.0).astype(jnp.float32).reshape(-1)
    sig = jax.nn.sigmoid(x).reshape(-1)
    inter = jnp.sum(tb * sig)
    union = jnp.sum(sig) + jnp.sum(tb)
    return bce - jaccard_weight * jnp.log((inter + smooth) / (union - inter + smooth))


if __name__ == "__main__":
    key = jax.random.PRNGKey(0)
    k1, k2 = jax.random.split(key)
    # NCHW-style shapes, matching typical segmentation logits/targets
    B, C, H, W = 2, 4, 16, 16
    outputs = jax.random.normal(k1, (B, C, H, W), dtype=jnp.float32)
    targets = (jax.random.uniform(k2, (B, C, H, W)) > 0.5).astype(jnp.float32)

    loss = bce_jaccard_with_logits_loss(outputs, targets)
    loss = jax.block_until_ready(loss)

    ref = _reference(outputs, targets)
    assert jnp.allclose(loss, ref, rtol=1e-5, atol=1e-5), (loss, ref)

    print("KERNEL_OK")
</pallas_src>

<mosaic_0001>
module attributes {stable_mosaic.version = 11 : i64} {
  func.func @kernel(%arg0: i32, %arg1: i32, %arg2: memref<8x128xf32, #tpu.memory_space<vmem>>, %arg3: memref<8x128xf32, #tpu.memory_space<vmem>>, %arg4: memref<1x4x8x128xf32, #tpu.memory_space<vmem>>) attributes {dimension_semantics = [#tpu.dimension_semantics<parallel>, #tpu.dimension_semantics<arbitrary>], iteration_bounds = array<i64: 2, 1>, scalar_prefetch = 0 : i64, scratch_operands = 0 : i64, tpu.core_type = #tpu.core_type<tc>, window_params = [{transform_indices = @transform_0, window_bounds = array<i64: 8, 128>}, {transform_indices = @transform_1, window_bounds = array<i64: 8, 128>}, {transform_indices = @transform_2, window_bounds = array<i64: 1, 4, 8, 128>}]} {
    %c0_i32 = arith.constant 0 : i32
    %0 = arith.cmpi eq, %arg1, %c0_i32 : i32
    %1 = arith.extui %0 : i1 to i32
    %c0_i32_0 = arith.constant 0 : i32
    %2 = arith.cmpi ne, %1, %c0_i32_0 : i32
    scf.if %2 {
      %cst_42 = arith.constant 0.000000e+00 : f32
      %63 = vector.broadcast %cst_42 : f32 to vector<4x8x128xf32>
      %c0_43 = arith.constant 0 : index
      %c0_44 = arith.constant 0 : index
      %c0_45 = arith.constant 0 : index
      %c0_46 = arith.constant 0 : index
      %64 = vector.load %arg4[%c0_43, %c0_44, %c0_45, %c0_46] : memref<1x4x8x128xf32, #tpu.memory_space<vmem>>, vector<1x4x8x128xf32>
      %65 = vector.shape_cast %64 : vector<1x4x8x128xf32> to vector<4x8x128xf32>
      %66 = vector.shape_cast %63 : vector<4x8x128xf32> to vector<1x4x8x128xf32>
      tpu.vector_store %arg4[%c0_43, %c0_44, %c0_45, %c0_46], %66 {strides = array<i32>} : memref<1x4x8x128xf32, #tpu.memory_space<vmem>>, vector<1x4x8x128xf32>,
    } else {
    }
    %c0 = arith.constant 0 : index
    %c0_1 = arith.constant 0 : index
    %3 = vector.load %arg2[%c0, %c0_1] : memref<8x128xf32, #tpu.memory_space<vmem>>, vector<8x128xf32>
    %c0_2 = arith.constant 0 : index
    %c0_3 = arith.constant 0 : index
    %4 = vector.load %arg3[%c0_2, %c0_3] : memref<8x128xf32, #tpu.memory_space<vmem>>, vector<8x128xf32>
    %5 = math.absf %3 : vector<8x128xf32>
    %cst = arith.constant 0.000000e+00 : f32
    %6 = vector.broadcast %cst : f32 to vector<8x128xf32>
    %7 = arith.subf %6, %5 : vector<8x128xf32>
    %8 = math.exp %7 : vector<8x128xf32>
    %cst_4 = arith.constant 1.000000e+00 : f32
    %9 = vector.broadcast %cst_4 : f32 to vector<8x128xf32>
    %10 = arith.addf %9, %8 : vector<8x128xf32>
    %11 = tpu.reciprocal %10 {approx = true} : vector<8x128xf32> -> vector<8x128xf32>
    %12 = arith.mulf %10, %11 : vector<8x128xf32>
    %cst_5 = arith.constant 2.000000e+00 : f32
    %13 = vector.broadcast %cst_5 : f32 to vector<8x128xf32>
    %14 = arith.subf %13, %12 : vector<8x128xf32>
    %15 = arith.mulf %11, %14 : vector<8x128xf32>
    %cst_6 = arith.constant 0.000000e+00 : f32
    %16 = vector.broadcast %cst_6 : f32 to vector<8x128xf32>
    %17 = arith.cmpf oge, %3, %16 : vector<8x128xf32>
    %18 = arith.mulf %8, %15 : vector<8x128xf32>
    %19 = arith.select %17, %15, %18 : vector<8x128xi1>, vector<8x128xf32>
    %cst_7 = arith.constant 0.000000e+00 : f32
    %20 = vector.broadcast %cst_7 : f32 to vector<8x128xf32>
    %21 = arith.maximumf %3, %20 : vector<8x128xf32>
    %22 = arith.mulf %3, %4 : vector<8x128xf32>
    %23 = arith.subf %21, %22 : vector<8x128xf32>
    %24 = math.log1p %8 : vector<8x128xf32>
    %25 = arith.addf %23, %24 : vector<8x128xf32>
    %cst_8 = arith.constant 1.000000e+00 : f32
    %26 = vector.broadcast %cst_8 : f32 to vector<8x128xf32>
    %27 = arith.cmpf oeq, %4, %26 : vector<8x128xf32>
    %28 = arith.extui %27 : vector<8x128xi1> to vector<8x128xi32>
    %29 = arith.sitofp %28 : vector<8x128xi32> to vector<8x128xf32>
    %30 = arith.mulf %29, %19 : vector<8x128xf32>
    %c0_9 = arith.constant 0 : index
    %c0_10 = arith.constant 0 : index
    %c0_11 = arith.constant 0 : index
    %c0_12 = arith.constant 0 : index
    %31 = vector.load %arg4[%c0_9, %c0_10, %c0_11, %c0_12] : memref<1x4x8x128xf32, #tpu.memory_space<vmem>>, vector<1x1x8x128xf32>
    %32 = vector.shape_cast %31 : vector<1x1x8x128xf32> to vector<8x128xf32>
    %33 = vector.shape_cast %25 : vector<8x128xf32> to vector<1x8x128xf32>
    %cst_13 = arith.constant dense<0.000000e+00> : vector<8x128xf32>
    %34 = vector.multi_reduction <add>, %33, %cst_13 [0] : vector<1x8x128xf32> to vector<8x128xf32>
    %35 = arith.addf %32, %34 : vector<8x128xf32>
    %c0_14 = arith.constant 0 : index
    %c0_15 = arith.constant 0 : index
    %c0_16 = arith.constant 0 : index
    %c0_17 = arith.constant 0 : index
    %36 = vector.load %arg4[%c0_14, %c0_15, %c0_16, %c0_17] : memref<1x4x8x128xf32, #tpu.memory_space<vmem>>, vector<1x1x8x128xf32>
    %37 = vector.shape_cast %36 : vector<1x1x8x128xf32> to vector<8x128xf32>
    %38 = vector.shape_cast %35 : vector<8x128xf32> to vector<1x1x8x128xf32>
    tpu.vector_store %arg4[%c0_14, %c0_15, %c0_16, %c0_17], %38 {strides = array<i32>} : memref<1x4x8x128xf32, #tpu.memory_space<vmem>>, vector<1x1x8x128xf32>,
    %c0_18 = arith.constant 0 : index
    %c1 = arith.constant 1 : index
    %c0_19 = arith.constant 0 : index
    %c0_20 = arith.constant 0 : index
    %39 = vector.load %arg4[%c0_18, %c1, %c0_19, %c0_20] : memref<1x4x8x128xf32, #tpu.memory_space<vmem>>, vector<1x1x8x128xf32>
    %40 = vector.shape_cast %39 : vector<1x1x8x128xf32> to vector<8x128xf32>
    %41 = vector.shape_cast %30 : vector<8x128xf32> to vector<1x8x128xf32>
    %cst_21 = arith.constant dense<0.000000e+00> : vector<8x128xf32>
    %42 = vector.multi_reduction <add>, %41, %cst_21 [0] : vector<1x8x128xf32> to vector<8x128xf32>
    %43 = arith.addf %40, %42 : vector<8x128xf32>
    %c0_22 = arith.constant 0 : index
    %c1_23 = arith.constant 1 : index
    %c0_24 = arith.constant 0 : index
    %c0_25 = arith.constant 0 : index
    %44 = vector.load %arg4[%c0_22, %c1_23, %c0_24, %c0_25] : memref<1x4x8x128xf32, #tpu.memory_space<vmem>>, vector<1x1x8x128xf32>
    %45 = vector.shape_cast %44 : vector<1x1x8x128xf32> to vector<8x128xf32>
    %46 = vector.shape_cast %43 : vector<8x128xf32> to vector<1x1x8x128xf32>
    tpu.vector_store %arg4[%c0_22, %c1_23, %c0_24, %c0_25], %46 {strides = array<i32>} : memref<1x4x8x128xf32, #tpu.memory_space<vmem>>, vector<1x1x8x128xf32>,
    %c0_26 = arith.constant 0 : index
    %c2 = arith.constant 2 : index
    %c0_27 = arith.constant 0 : index
    %c0_28 = arith.constant 0 : index
    %47 = vector.load %arg4[%c0_26, %c2, %c0_27, %c0_28] : memref<1x4x8x128xf32, #tpu.memory_space<vmem>>, vector<1x1x8x128xf32>
    %48 = vector.shape_cast %47 : vector<1x1x8x128xf32> to vector<8x128xf32>
    %49 = vector.shape_cast %19 : vector<8x128xf32> to vector<1x8x128xf32>
    %cst_29 = arith.constant dense<0.000000e+00> : vector<8x128xf32>
    %50 = vector.multi_reduction <add>, %49, %cst_29 [0] : vector<1x8x128xf32> to vector<8x128xf32>
    %51 = arith.addf %48, %50 : vector<8x128xf32>
    %c0_30 = arith.constant 0 : index
    %c2_31 = arith.constant 2 : index
    %c0_32 = arith.constant 0 : index
    %c0_33 = arith.constant 0 : index
    %52 = vector.load %arg4[%c0_30, %c2_31, %c0_32, %c0_33] : memref<1x4x8x128xf32, #tpu.memory_space<vmem>>, vector<1x1x8x128xf32>
    %53 = vector.shape_cast %52 : vector<1x1x8x128xf32> to vector<8x128xf32>
    %54 = vector.shape_cast %51 : vector<8x128xf32> to vector<1x1x8x128xf32>
    tpu.vector_store %arg4[%c0_30, %c2_31, %c0_32, %c0_33], %54 {strides = array<i32>} : memref<1x4x8x128xf32, #tpu.memory_space<vmem>>, vector<1x1x8x128xf32>,
    %c0_34 = arith.constant 0 : index
    %c3 = arith.constant 3 : index
    %c0_35 = arith.constant 0 : index
    %c0_36 = arith.constant 0 : index
    %55 = vector.load %arg4[%c0_34, %c3, %c0_35, %c0_36] : memref<1x4x8x128xf32, #tpu.memory_space<vmem>>, vector<1x1x8x128xf32>
    %56 = vector.shape_cast %55 : vector<1x1x8x128xf32> to vector<8x128xf32>
    %57 = vector.shape_cast %29 : vector<8x128xf32> to vector<1x8x128xf32>
    %cst_37 = arith.constant dense<0.000000e+00> : vector<8x128xf32>
    %58 = vector.multi_reduction <add>, %57, %cst_37 [0] : vector<1x8x128xf32> to vector<8x128xf32>
    %59 = arith.addf %56, %58 : vector<8x128xf32>
    %c0_38 = arith.constant 0 : index
    %c3_39 = arith.constant 3 : index
    %c0_40 = arith.constant 0 : index
    %c0_41 = arith.constant 0 : index
    %60 = vector.load %arg4[%c0_38, %c3_39, %c0_40, %c0_41] : memref<1x4x8x128xf32, #tpu.memory_space<vmem>>, vector<1x1x8x128xf32>
    %61 = vector.shape_cast %60 : vector<1x1x8x128xf32> to vector<8x128xf32>
    %62 = vector.shape_cast %59 : vector<8x128xf32> to vector<1x1x8x128xf32>
    tpu.vector_store %arg4[%c0_38, %c3_39, %c0_40, %c0_41], %62 {strides = array<i32>} : memref<1x4x8x128xf32, #tpu.memory_space<vmem>>, vector<1x1x8x128xf32>,
    return
  }
  func.func @transform_0(%arg0: i32, %arg1: i32) -> (i32, i32) {
    %c1_i32 = arith.constant 1 : i32
    %0 = arith.muli %arg0, %c1_i32 : i32
    %1 = arith.addi %0, %arg1 : i32
    %c1_i32_0 = arith.constant 1 : i32
    %2 = arith.minsi %1, %c1_i32_0 : i32
    %c0_i32 = arith.constant 0 : i32
    %c0_i32_1 = arith.constant 0 : i32
    return %2, %c0_i32 : i32, i32
  }
  func.func @transform_1(%arg0: i32, %arg1: i32) -> (i32, i32) {
    %c1_i32 = arith.constant 1 : i32
    %0 = arith.muli %arg0, %c1_i32 : i32
    %1 = arith.addi %0, %arg1 : i32
    %c1_i32_0 = arith.constant 1 : i32
    %2 = arith.minsi %1, %c1_i32_0 : i32
    %c0_i32 = arith.constant 0 : i32
    %c0_i32_1 = arith.constant 0 : i32
    return %2, %c0_i32 : i32, i32
  }
  func.func @transform_2(%arg0: i32, %arg1: i32) -> (i32, i32, i32, i32) {
    %c0_i32 = arith.constant 0 : i32
    %c0_i32_0 = arith.constant 0 : i32
    %c0_i32_1 = arith.constant 0 : i32
    %c0_i32_2 = arith.constant 0 : i32
    return %arg0, %c0_i32, %c0_i32_0, %c0_i32_1 : i32, i32, i32, i32
  }
}

</mosaic_0001>

<llo_original>
// kernel: tpu_custom_call.1
$region0: #{tpu_custom_call.1}
  #allocation0 [shape = 'u32[]', space=smem, size = 0x4, offset = 0x4, fixed_abs, tag = 'smem constant byte address 0x4 - core index']
  #allocation1 [shape = 'u32[144,128]{1,0:T(1,128)}', space=vmem, size = 0x12000, scoped, tag = 'internal scratch']
  %s0 = inlined_call_operand.hbm [shape: f32[16,128], index: 0, kind: input, shape index: {}]
  %s1 = inlined_call_operand.hbm [shape: f32[16,128], index: 1, kind: input, shape index: {}]
  %s2 = inlined_call_operand.hbm [shape: f32[2,4,8,128], index: 2, kind: output, shape index: {}]
  %s3 = sld [smem:[#allocation0]]
  $region53: #{tpu_custom_call.1} parent=0
    _
  %s5 = ssub.s32 1, %s3
  %s6 = scalar_select 0, %s5, %s3
  $region1: #{tpu_custom_call.1} parent=0
    #allocation2 [shape = 'u8[8192]{0}', space=vmem, size = 0x2000, scoped, tag = 'input window, operand 0']
    #allocation3 [shape = 's32[2]{0}', space=sflag, size = 0x8, scoped, tag = 'scoped memory for tpu_custom_call.1']
    #allocation4 [shape = 's32[2]{0}', space=sflag, size = 0x8, scoped, tag = 'scoped memory for tpu_custom_call.1']
    #allocation5 [shape = 'u8[8192]{0}', space=vmem, size = 0x2000, scoped, tag = 'input window, operand 1']
    #allocation6 [shape = 's32[2]{0}', space=sflag, size = 0x8, scoped, tag = 'scoped memory for tpu_custom_call.1']
    #allocation7 [shape = 'u8[32768]{0}', space=vmem, size = 0x8000, scoped, tag = 'output window, operand 0']
    %7 = vsyncpa [#allocation3], 0
    %s8 = scalar_lea.sflag [#allocation3], 1
    %9 = vsyncpa %s8, 0
    %10 = vsyncpa [#allocation6], 0
    %s11 = scalar_lea.sflag [#allocation6], 1
    %12 = vsyncpa %s11, 0
    %13 = vsyncpa [#allocation4], 0
    %s14 = scalar_lea.sflag [#allocation4], 1
    %15 = vsyncpa %s14, 0
    loop: start=0, step=1, limit=4
    $region2: #{tpu_custom_call.1} parent=1 // loop_pre_header
      _
    $region3: #{tpu_custom_call.1} parent=1 // loop_header
      %s17 = sphi 0, %s21
      %p18 = scmp.ge.s32.totalorder %s17, 4
      %s24 = sphi 0, %s36
      %s25 = sphi 0, %s32
      %s26 = sphi 0, %s24
      %s27 = sphi 0, %s25
      %s28 = sphi 0, %s26
      %s29 = sphi 0, %s27
      %s45 = sphi 0, %s47
      %s48 = sphi 0, %s45
      %s49 = sphi 0, %s48
      %s65 = sphi 0, %s49
      %s77 = sphi 0, %s79
      %s80 = sphi 0, %s77
      %s81 = sphi 0, %s80
      %s97 = sphi 0, %s81
      %s103 = sphi 0, %s105
      %s106 = sphi 0, %s103
      %s107 = sphi 0, %s106
      %s123 = sphi 0, %s107
    $region4: #{tpu_custom_call.1} parent=1 // loop_header_branch
      %20 = sbr.rel (%p18) target = $region8
    $region5: #{tpu_custom_call.1} parent=1 // loop_body
      %s22 = ssub.s32 %s17, 1
      %s23 = ssub.s32 %s17, 2
      %s30 = sadd.s32 1, %s25
      %p31 = scmp.ge.s32.totalorder %s30, 1
      %s32 = scalar_select %p31, 0, %s30
      %s33 = sadd.s32 1, %s24
      %s34 = scalar_select %p31, %s33, %s24
      %p35 = scmp.ge.s32.totalorder %s34, 2
      %s36 = scalar_select %p35, 0, %s34
      %s37 = sadd.s32 %s24, %s25
      %p38 = scmp.lt.s32.totalorder %s37, 1
      %s39 = scalar_select %p38, %s37, 1
      %s40 = sadd.s32 %s36, %s32
      %p41 = scmp.lt.s32.totalorder %s40, 1
      %s42 = scalar_select %p41, %s40, 1
      %s43 = ssub.s32 %s39, %s42
      %p44 = scmp.eq.s32.totalorder %s43, 0
      %s46 = sadd.s32 %s45, 1
      %s47 = scalar_select %p44, %s45, %s46
      %p50 = pneg %p44
      %p51 = scmp.eq.s32.totalorder %s17, 1
      %p52 = por %p50, %p51
      %p53 = scmp.ne.s32.totalorder %s45, %s48
      %p54 = scmp.eq.s32.totalorder %s17, 0
      %p55 = por %p53, %p54
      %p56 = scmp.ne.s32.totalorder %s45, %s48
      %p57 = scmp.eq.s32.totalorder %s22, 1
      %p58 = por %p56, %p57
      %p59 = scmp.ne.s32.totalorder %s48, %s49
      %p60 = scmp.eq.s32.totalorder %s22, 0
      %p61 = por %p59, %p60
      %p62 = scmp.ne.s32.totalorder %s48, %s49
      %p63 = scmp.eq.s32.totalorder %s23, 1
      %p64 = por %p62, %p63
      %p66 = scmp.ne.s32.totalorder %s49, %s65
      %p67 = scmp.eq.s32.totalorder %s23, 0
      %p68 = por %p66, %p67
      %s69 = sadd.s32 %s24, %s25
      %p70 = scmp.lt.s32.totalorder %s69, 1
      %s71 = scalar_select %p70, %s69, 1
      %s72 = sadd.s32 %s36, %s32
      %p73 = scmp.lt.s32.totalorder %s72, 1
      %s74 = scalar_select %p73, %s72, 1
      %s75 = ssub.s32 %s71, %s74
      %p76 = scmp.eq.s32.totalorder %s75, 0
      %s78 = sadd.s32 %s77, 1
      %s79 = scalar_select %p76, %s77, %s78
      %p82 = pneg %p76
      %p83 = scmp.eq.s32.totalorder %s17, 1
      %p84 = por %p82, %p83
      %p85 = scmp.ne.s32.totalorder %s77, %s80
      %p86 = scmp.eq.s32.totalorder %s17, 0
      %p87 = por %p85, %p86
      %p88 = scmp.ne.s32.totalorder %s77, %s80
      %p89 = scmp.eq.s32.totalorder %s22, 1
      %p90 = por %p88, %p89
      %p91 = scmp.ne.s32.totalorder %s80, %s81
      %p92 = scmp.eq.s32.totalorder %s22, 0
      %p93 = por %p91, %p92
      %p94 = scmp.ne.s32.totalorder %s80, %s81
      %p95 = scmp.eq.s32.totalorder %s23, 1
      %p96 = por %p94, %p95
      %p98 = scmp.ne.s32.totalorder %s81, %s97
      %p99 = scmp.eq.s32.totalorder %s23, 0
      %p100 = por %p98, %p99
      %s101 = ssub.s32 %s24, %s36
      %p102 = scmp.eq.s32.totalorder %s101, 0
      %s104 = sadd.s32 %s103, 1
      %s105 = scalar_select %p102, %s103, %s104
      %p108 = pneg %p102
      %p109 = scmp.eq.s32.totalorder %s17, 1
      %p110 = por %p108, %p109
      %p111 = scmp.ne.s32.totalorder %s103, %s106
      %p112 = scmp.eq.s32.totalorder %s17, 0
      %p113 = por %p111, %p112
      %p114 = scmp.ne.s32.totalorder %s103, %s106
      %p115 = scmp.eq.s32.totalorder %s22, 1
      %p116 = por %p114, %p115
      %p117 = scmp.ne.s32.totalorder %s106, %s107
      %p118 = scmp.eq.s32.totalorder %s22, 0
      %p119 = por %p117, %p118
      %p120 = scmp.ne.s32.totalorder %s106, %s107
      %p121 = scmp.eq.s32.totalorder %s23, 1
      %p122 = por %p120, %p121
      %p124 = scmp.ne.s32.totalorder %s107, %s123
      %p125 = scmp.eq.s32.totalorder %s23, 0
      %p126 = por %p124, %p125
      %p127 = scmp.le.s32.totalorder 1, %s17
      %p128 = scmp.lt.s32.totalorder %s17, 3
      %p129 = pnand %p127, %p128
      %p130 = pneg %p129
      // Predicated region
      $region9: #{tpu_custom_call.1} parent=5 // pred_check
        _
      $region10: #{tpu_custom_call.1} parent=5 // pred_check_branch
        %132 = sbr.rel (%p129) target = $region12
      $region11: #{tpu_custom_call.1} parent=5 // pred_region
        %s133 = ssub.s32 %s17, 1
      $region12: #{tpu_custom_call.1} parent=5 // pred_fallthru
        _
      %p134 = scmp.lt.s32.totalorder %s17, 2
      // Predicated region
      $region13: #{tpu_custom_call.1} parent=5 // pred_check
        %p135 = pneg %p134
      $region14: #{tpu_custom_call.1} parent=5 // pred_check_branch
        %137 = sbr.rel (%p135) target = $region16
      $region15: #{tpu_custom_call.1} parent=5 // pred_region
        // Predicated region
        $region17: #{tpu_custom_call.1} parent=15 // pred_check
          %p138 = pneg %p55
        $region18: #{tpu_custom_call.1} parent=15 // pred_check_branch
          %140 = sbr.rel (%p138) target = $region20
        $region19: #{tpu_custom_call.1} parent=15 // pred_region
          %s141 = sand.u32 %s45, 1
          %s142 = scalar_lea.sflag [#allocation3], %s141
          %s143 = sand.u32 %s45, 1
          %s144 = smul.addr %s143, 8
          %s145 = scalar_lea.vmem [#allocation2], %s144
          %s146 = sadd.s32 %s24, %s25
          %p147 = scmp.lt.s32.totalorder %s146, 1
          %s148 = scalar_select %p147, %s146, 1
          %s150 = ssub.s32 128, 128
          %151 = vsyncadd %s142, %s150
          %s152 = smul.addr %s148, 128
          %s153 = scalar_lea.hbm %s0, %s152
          %s155 = sshll.u32 %s145, 4
          %s156 = int_to_ptr.vmem [resolvable:$true] %s155
          %158 = dma.hbm_to_vmem [thread:$0]  %s153, 128, %s156, %s142
        $region20: #{tpu_custom_call.1} parent=15 // pred_fallthru
          _
        // Predicated region
        $region21: #{tpu_custom_call.1} parent=15 // pred_check
          %p159 = pneg %p87
        $region22: #{tpu_custom_call.1} parent=15 // pred_check_branch
          %161 = sbr.rel (%p159) target = $region24
        $region23: #{tpu_custom_call.1} parent=15 // pred_region
          %s162 = sand.u32 %s77, 1
          %s163 = scalar_lea.sflag [#allocation6], %s162
          %s164 = sand.u32 %s77, 1
          %s165 = smul.addr %s164, 8
          %s166 = scalar_lea.vmem [#allocation5], %s165
          %s167 = sadd.s32 %s24, %s25
          %p168 = scmp.lt.s32.totalorder %s167, 1
          %s169 = scalar_select %p168, %s167, 1
          %s171 = ssub.s32 128, 128
          %172 = vsyncadd %s163, %s171
          %s173 = smul.addr %s169, 128
          %s174 = scalar_lea.hbm %s1, %s173
          %s176 = sshll.u32 %s166, 4
          %s177 = int_to_ptr.vmem [resolvable:$true] %s176
          %179 = dma.hbm_to_vmem [thread:$0]  %s174, 128, %s177, %s163
        $region24: #{tpu_custom_call.1} parent=15 // pred_fallthru
          _
      $region16: #{tpu_custom_call.1} parent=5 // pred_fallthru
        _
      %p180 = scmp.le.s32.totalorder 1, %s17
      %p181 = scmp.lt.s32.totalorder %s17, 3
      %p182 = pnand %p180, %p181
      %p183 = pneg %p182
      // Predicated region
      $region25: #{tpu_custom_call.1} parent=5 // pred_check
        _
      $region26: #{tpu_custom_call.1} parent=5 // pred_check_branch
        %185 = sbr.rel (%p182) target = $region28
      $region27: #{tpu_custom_call.1} parent=5 // pred_region
        %s186 = ssub.s32 %s17, 1
        %s187 = sand.u32 %s48, 1
        %s188 = scalar_lea.sflag [#allocation3], %s187
        %s189 = sand.u32 %s48, 1
        %s190 = smul.addr %s189, 8
        %s191 = scalar_lea.vmem [#allocation2], %s190
        // Predicated region
        $region29: #{tpu_custom_call.1} parent=27 // pred_check
          %p192 = pneg %p61
        $region30: #{tpu_custom_call.1} parent=27 // pred_check_branch
          %194 = sbr.rel (%p192) target = $region32
        $region31: #{tpu_custom_call.1} parent=27 // pred_region
          %195 = dma.done %s188, 128
        $region32: #{tpu_custom_call.1} parent=27 // pred_fallthru
          _
        %s196 = sand.u32 %s80, 1
        %s197 = scalar_lea.sflag [#allocation6], %s196
        %s198 = sand.u32 %s80, 1
        %s199 = smul.addr %s198, 8
        %s200 = scalar_lea.vmem [#allocation5], %s199
        // Predicated region
        $region33: #{tpu_custom_call.1} parent=27 // pred_check
          %p201 = pneg %p93
        $region34: #{tpu_custom_call.1} parent=27 // pred_check_branch
          %203 = sbr.rel (%p201) target = $region36
        $region35: #{tpu_custom_call.1} parent=27 // pred_region
          %204 = dma.done %s197, 128
        $region36: #{tpu_custom_call.1} parent=27 // pred_fallthru
          _
        %s205 = sand.u32 %s48, 1
        %s206 = scalar_lea.sflag [#allocation3], %s205
        %s207 = sand.u32 %s48, 1
        %s208 = smul.addr %s207, 8
        %s209 = scalar_lea.vmem [#allocation2], %s208
        %p210 = pneg %p61
        %p211 = pneg %p58
        %s212 = sand.u32 %s80, 1
        %s213 = scalar_lea.sflag [#allocation6], %s212
        %s214 = sand.u32 %s80, 1
        %s215 = smul.addr %s214, 8
        %s216 = scalar_lea.vmem [#allocation5], %s215
        %p217 = pneg %p93
        %p218 = pneg %p90
        %p219 = pneg %p119
        %p220 = pneg %p116
        %s221 = sand.u32 %s106, 1
        %s222 = scalar_lea.sflag [#allocation4], %s221
        %s223 = sand.u32 %s106, 1
        %s224 = smul.addr %s223, 32
        %s225 = scalar_lea.vmem [#allocation7], %s224
        %s226 = sadd.s32 %s26, %s27
        %p227 = scmp.lt.s32.totalorder %s226, 1
        %s228 = scalar_select %p227, %s226, 1
        %s229 = sadd.s32 %s26, %s27
        %p230 = scmp.lt.s32.totalorder %s229, 1
        %s231 = scalar_select %p230, %s229, 1
        %p232 = scmp.eq.s32.totalorder %s27, 0
        // Predicated region
        $region37: #{tpu_custom_call.1} parent=27 // pred_check
          %p233 = pneg %p232
        $region38: #{tpu_custom_call.1} parent=27 // pred_check_branch
          %235 = sbr.rel (%p233) target = $region40
        $region39: #{tpu_custom_call.1} parent=27 // pred_region
          %236 = vst [vmem:[%s225] sm:$0xff] 0.0
          %237 = vst [vmem:[%s225 + $0x8] sm:$0xff] 0.0
          %238 = vst [vmem:[%s225 + $0x10] sm:$0xff] 0.0
          %239 = vst [vmem:[%s225 + $0x18] sm:$0xff] 0.0
        $region40: #{tpu_custom_call.1} parent=27 // pred_fallthru
          _
        %v240 = vld [vmem:[%s191] sm:$0xff]
        %v241 = vld [vmem:[%s200] sm:$0xff]
        %v242 = vand.u32 2147483647, %v240
        %v243 = vsub.f32 0.0, %v242
        %v244 = vmul.f32 %v243, 1.442695
        %v245 = vpow.pop %v244
        %v246 = vadd.f32 %v245, 1.0
        %v247 = vrcp.pop %v246
        %v248 = vmul.f32 %v246, %v247
        %v249 = vsub.f32 2.0, %v248
        %v250 = vmul.f32 %v247, %v249
        %vm251 = vcmp.ge.f32.partialorder %v240, 0.0
        %v252 = vmul.f32 %v245, %v250
        %v253 = vsel %vm251, %v250, %v252
        %v254 = vmax.f32 %v240, 0.0
        %v255 = vmul.f32 %v240, %v241
        %v256 = vsub.f32 %v254, %v255
        %v257 = vadd.f32 %v245, 1.0
        %v258 = vlog2.pop %v257
        %v259 = vmul.f32 %v258, 0.6931472
        %v260 = vmul.f32 -0.5, %v245
        %v261 = vadd.f32 %v260, 1.0
        %v262 = vmul.f32 %v261, %v245
        %v263 = vand.u32 2147483647, %v245
        %vm264 = vcmp.lt.f32.partialorder %v263, 0.0004427343
        %v265 = vsel %vm264, %v262, %v259
        %v266 = vadd.f32 %v256, %v265
        %vm267 = vcmp.eq.f32.partialorder %v241, 1.0
        %v268 = vsel %vm267, 1, 0
        %v269 = vcvt.s32.f32 %v268
        %v270 = vmul.f32 %v269, %v253
        %v271 = vld [vmem:[%s225] sm:$0xff]
        %v272 = vadd.f32 %v266, 0.0
        %v273 = vadd.f32 %v271, %v272
        %274 = vst [vmem:[%s225] sm:$0xff] %v273
        %s275 = scalar_lea.vmem %s225, 8 [#allocation7]
        %v276 = vld [vmem:[%s275] sm:$0xff]
        %v277 = vadd.f32 %v270, 0.0
        %v278 = vadd.f32 %v276, %v277
        %279 = vst [vmem:[%s275] sm:$0xff] %v278
        %s280 = scalar_lea.vmem %s225, 16 [#allocation7]
        %v281 = vld [vmem:[%s280] sm:$0xff]
        %v282 = vadd.f32 %v253, 0.0
        %v283 = vadd.f32 %v281, %v282
        %284 = vst [vmem:[%s280] sm:$0xff] %v283
        %s285 = scalar_lea.vmem %s225, 24 [#allocation7]
        %v286 = vld [vmem:[%s285] sm:$0xff]
        %v287 = vadd.f32 %v269, 0.0
        %v288 = vadd.f32 %v286, %v287
        %289 = vst [vmem:[%s285] sm:$0xff] %v288
        %s290 = sand.u32 %s106, 1
        %s291 = scalar_lea.sflag [#allocation4], %s290
        %s292 = sand.u32 %s106, 1
        %s293 = smul.addr %s292, 32
        %s294 = scalar_lea.vmem [#allocation7], %s293
        // Predicated region
        $region41: #{tpu_custom_call.1} parent=27 // pred_check
          %p295 = pneg %p116
        $region42: #{tpu_custom_call.1} parent=27 // pred_check_branch
          %297 = sbr.rel (%p295) target = $region44
        $region43: #{tpu_custom_call.1} parent=27 // pred_region
          %s299 = ssub.s32 512, 512
          %300 = vsyncadd %s291, %s299
          %s301 = smul.addr %s26, 4
          %s302 = smul.addr %s301, 128
          %s303 = scalar_lea.hbm %s2, %s302
          %s304 = sshll.u32 %s294, 4
          %s305 = int_to_ptr.vmem [resolvable:$true] %s304
          %310 = dma.vmem_to_hbm [thread:$0]  %s305, 512, %s303, %s291, 128, 128, 8
        $region44: #{tpu_custom_call.1} parent=27 // pred_fallthru
          _
      $region28: #{tpu_custom_call.1} parent=5 // pred_fallthru
        _
      %p311 = scmp.le.s32.totalorder 2, %s17
      // Predicated region
      $region45: #{tpu_custom_call.1} parent=5 // pred_check
        %p312 = pneg %p311
      $region46: #{tpu_custom_call.1} parent=5 // pred_check_branch
        %314 = sbr.rel (%p312) target = $region48
      $region47: #{tpu_custom_call.1} parent=5 // pred_region
        %s315 = ssub.s32 %s17, 2
        // Predicated region
        $region49: #{tpu_custom_call.1} parent=47 // pred_check
          %p316 = pneg %p122
        $region50: #{tpu_custom_call.1} parent=47 // pred_check_branch
          %318 = sbr.rel (%p316) target = $region52
        $region51: #{tpu_custom_call.1} parent=47 // pred_region
          %s319 = sand.u32 %s107, 1
          %s320 = scalar_lea.sflag [#allocation4], %s319
          %s321 = sand.u32 %s107, 1
          %s322 = smul.addr %s321, 32
          %s323 = scalar_lea.vmem [#allocation7], %s322
          %324 = dma.done %s320, 512
        $region52: #{tpu_custom_call.1} parent=47 // pred_fallthru
          _
      $region48: #{tpu_custom_call.1} parent=5 // pred_fallthru
        _
    $region6: #{tpu_custom_call.1} parent=1 // loop_footer
      %s21 = sadd.s32 1, %s17
    $region7: #{tpu_custom_call.1} parent=1 // loop_footer_branch
      %16 = sbr.rel target = $region3
    $region8: #{tpu_custom_call.1} parent=1 // loop_exit
      _
    %325 = vsyncpa [#allocation3], 1
    %s326 = scalar_lea.sflag [#allocation3], 1
    %327 = vsyncpa %s326, 1
    %328 = vsyncpa [#allocation6], 1
    %s329 = scalar_lea.sflag [#allocation6], 1
    %330 = vsyncpa %s329, 1
    %331 = vsyncpa [#allocation4], 1
    %s332 = scalar_lea.sflag [#allocation4], 1
    %333 = vsyncpa %s332, 1

</llo_original>
